<compile_context>
chip_gen: v7x
topology: tpu7x:2x2x1
jax: 0.10.0
libtpu: 0.0.40
codegen_flags: <defaults>
</compile_context>

<pallas_src>
import functools

import jax
import jax.numpy as jnp
from jax import lax
from jax.experimental import pallas as pl
from jax.experimental.pallas import tpu as pltpu


def char_lstm_kernel(seq_len, seq_block,
                     xw_ref, h0_ref, c0_ref, whh_ref, wfc_ref, bfc_ref,
                     out_ref, hn_ref, cn_ref,
                     h_s, c_s):
    """One grid step processes `seq_block` timesteps.

    xw_ref  : (ts, B, 4H) precomputed input-gate pre-activations
              (emb @ W_ih^T + b, gate order (i,f,o,g); sigmoid lanes pre-scaled
              by 0.5 so sigmoid(x) == 0.5*tanh(gates) + 0.5)
    h0/c0   : (B, H)  initial states
    whh_ref : (H, 4H) hidden->gate weights (transposed, reordered, pre-scaled)
    wfc_ref : (H, Vp) final linear weights (transposed, lane-padded)
    bfc_ref : (1, Vp) final linear bias (lane-padded)
    out_ref : (B, Vp) logits of the last valid timestep (wrapper slices to V)
    hn/cn   : (B, H)  final states
    h_s/c_s : (B, H)  VMEM scratch carrying the recurrent state across the grid
    """
    s_idx = pl.program_id(0)
    B, H = h0_ref.shape
    G = 4 * H

    @pl.when(s_idx == 0)
    def _init():
        h_s[...] = h0_ref[...]
        c_s[...] = c0_ref[...]

    whh = whh_ref[...]

    # Hoisted per-lane affine turning tanh into sigmoid on the (i,f,o) lanes:
    #   act = tanh(gates) * post_mul + post_add
    lane = lax.broadcasted_iota(jnp.int32, (B, G), dimension=1)
    is_sig = lane < 3 * H
    post_mul = jnp.where(is_sig, 0.5, 1.0).astype(jnp.float32)
    post_add = jnp.where(is_sig, 0.5, 0.0).astype(jnp.float32)

    base = s_idx * seq_block
    needs_mask = (seq_len % seq_block) != 0  # static Python bool

    def step(t, carry):
        h, c = carry
        # Only the h-dependent matmul sits on the recurrence critical path.
        gates = xw_ref[t] + jnp.dot(h, whh, preferred_element_type=jnp.float32)
        act = jnp.tanh(gates) * post_mul + post_add   # one full-tile EUP op
        i_g = act[:, 0 * H:1 * H]
        f_g = act[:, 1 * H:2 * H]
        o_g = act[:, 2 * H:3 * H]
        g_g = act[:, 3 * H:4 * H]
        c_new = f_g * c + i_g * g_g
        h_new = o_g * jnp.tanh(c_new)
        if needs_mask:  # only traced when the last block contains padded steps
            valid = (base + t) < seq_len
            h_new = jnp.where(valid, h_new, h)
            c_new = jnp.where(valid, c_new, c)
        return h_new, c_new

    # Static trip count -> fully unroll so adjacent timesteps' MXU/EUP/VPU work
    # can interleave instead of serializing at loop boundaries.
    h, c = lax.fori_loop(0, seq_block, step, (h_s[...], c_s[...]), unroll=True)
    h_s[...] = h
    c_s[...] = c

    @pl.when(s_idx == pl.num_programs(0) - 1)
    def _finalize():
        out_ref[...] = (
            jnp.dot(h, wfc_ref[...], preferred_element_type=jnp.float32)
            + bfc_ref[...])
        hn_ref[...] = h
        cn_ref[...] = c


def char_lstm_forward(x_ids, hidden, params, *, seq_block=32):
    """Mirrors CharLSTM.forward(x, hidden) -> (logits, (h_n, c_n))."""
    emb, w_ih, w_hh, b_ih, b_hh, w_fc, b_fc = (
        params["emb"], params["w_ih"], params["w_hh"],
        params["b_ih"], params["b_hh"], params["w_fc"], params["b_fc"])
    h0, c0 = hidden                        # each (1, B, H), PyTorch convention
    B, S = x_ids.shape
    V, H = emb.shape
    O = w_fc.shape[0]

    # Reorder PyTorch gate blocks (i, f, g, o) -> (i, f, o, g): sigmoid gates
    # occupy the first 3H lanes, the tanh gate the last H lanes.
    perm = jnp.concatenate([jnp.arange(0, 2 * H),        # i, f
                            jnp.arange(3 * H, 4 * H),    # o
                            jnp.arange(2 * H, 3 * H)])   # g
    # Fold the 0.5 pre-scale of sigmoid(x) = 0.5*tanh(x/2) + 0.5 into the
    # weights so the kernel's per-step gate activation is a single tanh.
    gate_scale = jnp.concatenate([jnp.full((3 * H,), 0.5, jnp.float32),
                                  jnp.ones((H,), jnp.float32)])
    w_ih_r = w_ih[perm] * gate_scale[:, None]            # (4H, H)
    w_hh_r = w_hh[perm] * gate_scale[:, None]            # (4H, H)
    b_r = (b_ih + b_hh)[perm] * gate_scale               # (4H,)

    # Fold the embedding into the input->gate path and precompute ALL timesteps'
    # input contributions (bias included): no one-hot tensor, no per-step
    # embedding/input matmuls inside the recurrence.
    table = emb @ w_ih_r.T + b_r[None, :]                # (V, 4H)
    xw = jnp.take(table, x_ids, axis=0)                  # (B, S, 4H)
    xw = jnp.transpose(xw, (1, 0, 2))                    # (S, B, 4H) time-major

    ts = max(1, min(seq_block, S))
    ns = pl.cdiv(S, ts)
    Sp = ns * ts
    if Sp != S:                                          # zero-pad; masked in-kernel
        xw = jnp.pad(xw, ((0, Sp - S), (0, 0), (0, 0)))

    whh_t = w_hh_r.T                                     # (H, 4H)

    # Lane-dense logits: pad the output vocab to a multiple of 128.
    Vp = ((O + 127) // 128) * 128
    wfc_t = jnp.zeros((H, Vp), jnp.float32).at[:, :O].set(w_fc.T)
    bfc = jnp.zeros((1, Vp), jnp.float32).at[:, :O].set(b_fc)

    G = 4 * H
    flops = Sp * (2 * B * H * G) + 2 * B * H * Vp
    transcendentals = Sp * B * (G + H)
    bytes_accessed = 4 * (Sp * B * G + 2 * B * H + H * G + H * Vp
                          + Vp + B * Vp + 2 * B * H)
    cost = pl.CostEstimate(flops=flops, transcendentals=transcendentals,
                           bytes_accessed=bytes_accessed)

    kernel = functools.partial(char_lstm_kernel, S, ts)

    grid_spec = pltpu.PrefetchScalarGridSpec(
        num_scalar_prefetch=0,
        grid=(ns,),
        in_specs=[
            pl.BlockSpec((ts, B, G), lambda s: (s, 0, 0)),    # streamed xw tiles
            pl.BlockSpec((B, H), lambda s: (0, 0)),           # h0
            pl.BlockSpec((B, H), lambda s: (0, 0)),           # c0
            pl.BlockSpec((H, G), lambda s: (0, 0)),           # W_hh^T
            pl.BlockSpec((H, Vp), lambda s: (0, 0)),          # W_fc^T (padded)
            pl.BlockSpec((1, Vp), lambda s: (0, 0)),          # b_fc (padded)
        ],
        out_specs=(
            pl.BlockSpec((B, Vp), lambda s: (0, 0)),
            pl.BlockSpec((B, H), lambda s: (0, 0)),
            pl.BlockSpec((B, H), lambda s: (0, 0)),
        ),
        scratch_shapes=[pltpu.VMEM((B, H), jnp.float32),
                        pltpu.VMEM((B, H), jnp.float32)],
    )

    # TODO(synk): for large batches add a leading "parallel" batch-block grid
    # axis (engages the 2nd TensorCore on v7x); the sequence axis must stay
    # "arbitrary" because of the recurrent carry.
    logits_p, h_n, c_n = pl.pallas_call(
        kernel,
        out_shape=(
            jax.ShapeDtypeStruct((B, Vp), jnp.float32),
            jax.ShapeDtypeStruct((B, H), jnp.float32),
            jax.ShapeDtypeStruct((B, H), jnp.float32),
        ),
        grid_spec=grid_spec,
        compiler_params=pltpu.CompilerParams(
            dimension_semantics=("arbitrary",)),
        cost_estimate=cost,
    )(xw, h0[0], c0[0], whh_t, wfc_t, bfc)

    logits = logits_p[:, :O]
    return logits, (h_n[None, :, :], c_n[None, :, :])


def init_params(key, input_size, hidden_size, output_size):
    """Deterministic synthetic parameters with PyTorch-like shapes."""
    H = hidden_size
    k_emb, k_wih, k_whh, k_bih, k_bhh, k_wfc, k_bfc = jax.random.split(key, 7)
    s = 1.0 / jnp.sqrt(H)
    return {
        "emb": jax.random.normal(k_emb, (input_size, H), jnp.float32) * 0.1,
        "w_ih": jax.random.uniform(k_wih, (4 * H, H), jnp.float32, -s, s),
        "w_hh": jax.random.uniform(k_whh, (4 * H, H), jnp.float32, -s, s),
        "b_ih": jax.random.uniform(k_bih, (4 * H,), jnp.float32, -s, s),
        "b_hh": jax.random.uniform(k_bhh, (4 * H,), jnp.float32, -s, s),
        "w_fc": jax.random.uniform(k_wfc, (output_size, H), jnp.float32, -s, s),
        "b_fc": jax.random.uniform(k_bfc, (output_size,), jnp.float32, -s, s),
    }


def reference_forward(x_ids, hidden, params):
    """Pure-JAX reference with PyTorch LSTM semantics (gate order i, f, g, o)."""
    emb = params["emb"]
    H = emb.shape[1]
    h = hidden[0][0]
    c = hidden[1][0]
    x_emb = jnp.take(emb, x_ids, axis=0)                   # (B, S, H)
    S = x_ids.shape[1]
    for t in range(S):
        x_t = x_emb[:, t, :]
        gates = (x_t @ params["w_ih"].T + params["b_ih"]
                 + h @ params["w_hh"].T + params["b_hh"])
        i_g = jax.nn.sigmoid(gates[:, 0 * H:1 * H])
        f_g = jax.nn.sigmoid(gates[:, 1 * H:2 * H])
        g_g = jnp.tanh(gates[:, 2 * H:3 * H])
        o_g = jax.nn.sigmoid(gates[:, 3 * H:4 * H])
        c = f_g * c + i_g * g_g
        h = o_g * jnp.tanh(c)
    logits = h @ params["w_fc"].T + params["b_fc"]
    return logits, (h[None], c[None])


if __name__ == "__main__":
    # Small, CharLSTM-consistent shapes: vocab=65 (tinyshakespeare charset),
    # batch=2, seq=8, hidden=32.
    V, H, B, S = 65, 32, 2, 8

    key = jax.random.PRNGKey(0)
    k_params, k_x = jax.random.split(key)
    params = init_params(k_params, V, H, V)

    x_ids = jax.random.randint(k_x, (B, S), 0, V, dtype=jnp.int32)
    hidden = (jnp.zeros((1, B, H), jnp.float32),
              jnp.zeros((1, B, H), jnp.float32))   # init_hidden

    ref_logits, (ref_h, ref_c) = reference_forward(x_ids, hidden, params)

    # Path 1: whole sequence in a single grid step.
    logits, (h_n, c_n) = char_lstm_forward(x_ids, hidden, params)
    jax.block_until_ready((logits, h_n, c_n))
    assert jnp.allclose(logits, ref_logits, atol=1e-4, rtol=1e-4)
    assert jnp.allclose(h_n, ref_h, atol=1e-4, rtol=1e-4)
    assert jnp.allclose(c_n, ref_c, atol=1e-4, rtol=1e-4)

    # Path 2: multi-step sequence grid (h/c carried in VMEM scratch) with a
    # block size that does NOT divide S, exercising the tail-masking path.
    logits2, (h_n2, c_n2) = char_lstm_forward(x_ids, hidden, params, seq_block=3)
    jax.block_until_ready((logits2, h_n2, c_n2))
    assert jnp.allclose(logits2, ref_logits, atol=1e-4, rtol=1e-4)
    assert jnp.allclose(h_n2, ref_h, atol=1e-4, rtol=1e-4)
    assert jnp.allclose(c_n2, ref_c, atol=1e-4, rtol=1e-4)

    print("KERNEL_OK")
</pallas_src>

<mosaic_0001>
module attributes {stable_mosaic.version = 11 : i64} {
  func.func @char_lstm_kernel(%arg0: i32, %arg1: memref<8x2x128xf32, #tpu.memory_space<vmem>>, %arg2: memref<2x32xf32, #tpu.memory_space<vmem>>, %arg3: memref<2x32xf32, #tpu.memory_space<vmem>>, %arg4: memref<32x128xf32, #tpu.memory_space<vmem>>, %arg5: memref<32x128xf32, #tpu.memory_space<vmem>>, %arg6: memref<1x128xf32, #tpu.memory_space<vmem>>, %arg7: memref<2x128xf32, #tpu.memory_space<vmem>>, %arg8: memref<2x32xf32, #tpu.memory_space<vmem>>, %arg9: memref<2x32xf32, #tpu.memory_space<vmem>>, %arg10: memref<2x32xf32, #tpu.memory_space<vmem>>, %arg11: memref<2x32xf32, #tpu.memory_space<vmem>>) attributes {dimension_semantics = [#tpu.dimension_semantics<arbitrary>], iteration_bounds = array<i64: 1>, scalar_prefetch = 0 : i64, scratch_operands = 2 : i64, tpu.core_type = #tpu.core_type<tc>, window_params = [{transform_indices = @transform_0, window_bounds = array<i64: 8, 2, 128>}, {pipeline_mode = #tpu.pipeline_mode<synchronous>, transform_indices = @transform_1, window_bounds = array<i64: 2, 32>}, {pipeline_mode = #tpu.pipeline_mode<synchronous>, transform_indices = @transform_2, window_bounds = array<i64: 2, 32>}, {pipeline_mode = #tpu.pipeline_mode<synchronous>, transform_indices = @transform_3, window_bounds = array<i64: 32, 128>}, {pipeline_mode = #tpu.pipeline_mode<synchronous>, transform_indices = @transform_4, window_bounds = array<i64: 32, 128>}, {pipeline_mode = #tpu.pipeline_mode<synchronous>, transform_indices = @transform_5, window_bounds = array<i64: 1, 128>}, {pipeline_mode = #tpu.pipeline_mode<synchronous>, transform_indices = @transform_6, window_bounds = array<i64: 2, 128>}, {pipeline_mode = #tpu.pipeline_mode<synchronous>, transform_indices = @transform_7, window_bounds = array<i64: 2, 32>}, {pipeline_mode = #tpu.pipeline_mode<synchronous>, transform_indices = @transform_8, window_bounds = array<i64: 2, 32>}]} {
    %c0_i32 = arith.constant 0 : i32
    %0 = arith.cmpi eq, %arg0, %c0_i32 : i32
    %1 = arith.extui %0 : i1 to i32
    %c0_i32_0 = arith.constant 0 : i32
    %2 = arith.cmpi ne, %1, %c0_i32_0 : i32
    scf.if %2 {
      %c0_40 = arith.constant 0 : index
      %c0_41 = arith.constant 0 : index
      %156 = vector.load %arg2[%c0_40, %c0_41] : memref<2x32xf32, #tpu.memory_space<vmem>>, vector<2x32xf32>
      %c0_42 = arith.constant 0 : index
      %c0_43 = arith.constant 0 : index
      %157 = vector.load %arg10[%c0_42, %c0_43] : memref<2x32xf32, #tpu.memory_space<vmem>>, vector<2x32xf32>
      tpu.vector_store %arg10[%c0_42, %c0_43], %156 {strides = array<i32>} : memref<2x32xf32, #tpu.memory_space<vmem>>, vector<2x32xf32>,
      %c0_44 = arith.constant 0 : index
      %c0_45 = arith.constant 0 : index
      %158 = vector.load %arg3[%c0_44, %c0_45] : memref<2x32xf32, #tpu.memory_space<vmem>>, vector<2x32xf32>
      %c0_46 = arith.constant 0 : index
      %c0_47 = arith.constant 0 : index
      %159 = vector.load %arg11[%c0_46, %c0_47] : memref<2x32xf32, #tpu.memory_space<vmem>>, vector<2x32xf32>
      tpu.vector_store %arg11[%c0_46, %c0_47], %158 {strides = array<i32>} : memref<2x32xf32, #tpu.memory_space<vmem>>, vector<2x32xf32>,
    } else {
    }
    %c0 = arith.constant 0 : index
    %c0_1 = arith.constant 0 : index
    %3 = vector.load %arg4[%c0, %c0_1] : memref<32x128xf32, #tpu.memory_space<vmem>>, vector<32x128xf32>
    %4 = tpu.iota {dimensions = array<i32: 1>} : vector<2x128xi32>
    %c96_i32 = arith.constant 96 : i32
    %5 = vector.broadcast %c96_i32 : i32 to vector<2x128xi32>
    %6 = arith.cmpi slt, %4, %5 : vector<2x128xi32>
    %cst = arith.constant 5.000000e-01 : f32
    %cst_2 = arith.constant 1.000000e+00 : f32
    %7 = vector.broadcast %cst : f32 to vector<2x128xf32>
    %8 = vector.broadcast %cst_2 : f32 to vector<2x128xf32>
    %9 = arith.select %6, %7, %8 : vector<2x128xi1>, vector<2x128xf32>
    %cst_3 = arith.constant 5.000000e-01 : f32
    %cst_4 = arith.constant 0.000000e+00 : f32
    %10 = vector.broadcast %cst_3 : f32 to vector<2x128xf32>
    %11 = vector.broadcast %cst_4 : f32 to vector<2x128xf32>
    %12 = arith.select %6, %10, %11 : vector<2x128xi1>, vector<2x128xf32>
    %c0_5 = arith.constant 0 : index
    %c0_6 = arith.constant 0 : index
    %13 = vector.load %arg10[%c0_5, %c0_6] : memref<2x32xf32, #tpu.memory_space<vmem>>, vector<2x32xf32>
    %c0_7 = arith.constant 0 : index
    %c0_8 = arith.constant 0 : index
    %14 = vector.load %arg11[%c0_7, %c0_8] : memref<2x32xf32, #tpu.memory_space<vmem>>, vector<2x32xf32>
    %c0_i32_9 = arith.constant 0 : i32
    %15 = arith.index_cast %c0_i32_9 : i32 to index
    %c0_10 = arith.constant 0 : index
    %c0_11 = arith.constant 0 : index
    %16 = vector.load %arg1[%15, %c0_10, %c0_11] : memref<8x2x128xf32, #tpu.memory_space<vmem>>, vector<1x2x128xf32>
    %17 = vector.shape_cast %16 : vector<1x2x128xf32> to vector<2x128xf32>
    %cst_12 = arith.constant dense<0.000000e+00> : vector<2x128xf32>
    %18 = tpu.matmul %13, %3, %cst_12 {dimension_numbers = #tpu.dot_dimension_numbers<[1], [0], [0], [1], [0, 0, 1, 1], [], []>} : vector<2x32xf32>, vector<32x128xf32>, vector<2x128xf32> -> vector<2x128xf32>
    %19 = arith.addf %17, %18 : vector<2x128xf32>
    %20 = math.tanh %19 : vector<2x128xf32>
    %21 = arith.mulf %20, %9 : vector<2x128xf32>
    %22 = arith.addf %21, %12 : vector<2x128xf32>
    %23 = vector.extract_strided_slice %22 {offsets = [0, 0], sizes = [2, 32], strides = [1, 1]} : vector<2x128xf32> to vector<2x32xf32>
    %24 = vector.extract_strided_slice %22 {offsets = [0, 32], sizes = [2, 32], strides = [1, 1]} : vector<2x128xf32> to vector<2x32xf32>
    %25 = vector.extract_strided_slice %22 {offsets = [0, 64], sizes = [2, 32], strides = [1, 1]} : vector<2x128xf32> to vector<2x32xf32>
    %26 = vector.extract_strided_slice %22 {offsets = [0, 96], sizes = [2, 32], strides = [1, 1]} : vector<2x128xf32> to vector<2x32xf32>
    %27 = arith.mulf %24, %14 : vector<2x32xf32>
    %28 = arith.mulf %23, %26 : vector<2x32xf32>
    %29 = arith.addf %27, %28 : vector<2x32xf32>
    %30 = math.tanh %29 : vector<2x32xf32>
    %31 = arith.mulf %25, %30 : vector<2x32xf32>
    %c1_i32 = arith.constant 1 : i32
    %32 = arith.index_cast %c1_i32 : i32 to index
    %c0_13 = arith.constant 0 : index
    %c0_14 = arith.constant 0 : index
    %33 = vector.load %arg1[%32, %c0_13, %c0_14] : memref<8x2x128xf32, #tpu.memory_space<vmem>>, vector<1x2x128xf32>
    %34 = vector.shape_cast %33 : vector<1x2x128xf32> to vector<2x128xf32>
    %cst_15 = arith.constant dense<0.000000e+00> : vector<2x128xf32>
    %35 = tpu.matmul %31, %3, %cst_15 {dimension_numbers = #tpu.dot_dimension_numbers<[1], [0], [0], [1], [0, 0, 1, 1], [], []>} : vector<2x32xf32>, vector<32x128xf32>, vector<2x128xf32> -> vector<2x128xf32>
    %36 = arith.addf %34, %35 : vector<2x128xf32>
    %37 = math.tanh %36 : vector<2x128xf32>
    %38 = arith.mulf %37, %9 : vector<2x128xf32>
    %39 = arith.addf %38, %12 : vector<2x128xf32>
    %40 = vector.extract_strided_slice %39 {offsets = [0, 0], sizes = [2, 32], strides = [1, 1]} : vector<2x128xf32> to vector<2x32xf32>
    %41 = vector.extract_strided_slice %39 {offsets = [0, 32], sizes = [2, 32], strides = [1, 1]} : vector<2x128xf32> to vector<2x32xf32>
    %42 = vector.extract_strided_slice %39 {offsets = [0, 64], sizes = [2, 32], strides = [1, 1]} : vector<2x128xf32> to vector<2x32xf32>
    %43 = vector.extract_strided_slice %39 {offsets = [0, 96], sizes = [2, 32], strides = [1, 1]} : vector<2x128xf32> to vector<2x32xf32>
    %44 = arith.mulf %41, %29 : vector<2x32xf32>
    %45 = arith.mulf %40, %43 : vector<2x32xf32>
    %46 = arith.addf %44, %45 : vector<2x32xf32>
    %47 = math.tanh %46 : vector<2x32xf32>
    %48 = arith.mulf %42, %47 : vector<2x32xf32>
    %c2_i32 = arith.constant 2 : i32
    %49 = arith.index_cast %c2_i32 : i32 to index
    %c0_16 = arith.constant 0 : index
    %c0_17 = arith.constant 0 : index
    %50 = vector.load %arg1[%49, %c0_16, %c0_17] : memref<8x2x128xf32, #tpu.memory_space<vmem>>, vector<1x2x128xf32>
    %51 = vector.shape_cast %50 : vector<1x2x128xf32> to vector<2x128xf32>
    %cst_18 = arith.constant dense<0.000000e+00> : vector<2x128xf32>
    %52 = tpu.matmul %48, %3, %cst_18 {dimension_numbers = #tpu.dot_dimension_numbers<[1], [0], [0], [1], [0, 0, 1, 1], [], []>} : vector<2x32xf32>, vector<32x128xf32>, vector<2x128xf32> -> vector<2x128xf32>
    %53 = arith.addf %51, %52 : vector<2x128xf32>
    %54 = math.tanh %53 : vector<2x128xf32>
    %55 = arith.mulf %54, %9 : vector<2x128xf32>
    %56 = arith.addf %55, %12 : vector<2x128xf32>
    %57 = vector.extract_strided_slice %56 {offsets = [0, 0], sizes = [2, 32], strides = [1, 1]} : vector<2x128xf32> to vector<2x32xf32>
    %58 = vector.extract_strided_slice %56 {offsets = [0, 32], sizes = [2, 32], strides = [1, 1]} : vector<2x128xf32> to vector<2x32xf32>
    %59 = vector.extract_strided_slice %56 {offsets = [0, 64], sizes = [2, 32], strides = [1, 1]} : vector<2x128xf32> to vector<2x32xf32>
    %60 = vector.extract_strided_slice %56 {offsets = [0, 96], sizes = [2, 32], strides = [1, 1]} : vector<2x128xf32> to vector<2x32xf32>
    %61 = arith.mulf %58, %46 : vector<2x32xf32>
    %62 = arith.mulf %57, %60 : vector<2x32xf32>
    %63 = arith.addf %61, %62 : vector<2x32xf32>
    %64 = math.tanh %63 : vector<2x32xf32>
    %65 = arith.mulf %59, %64 : vector<2x32xf32>
    %c3_i32 = arith.constant 3 : i32
    %66 = arith.index_cast %c3_i32 : i32 to index
    %c0_19 = arith.constant 0 : index
    %c0_20 = arith.constant 0 : index
    %67 = vector.load %arg1[%66, %c0_19, %c0_20] : memref<8x2x128xf32, #tpu.memory_space<vmem>>, vector<1x2x128xf32>
    %68 = vector.shape_cast %67 : vector<1x2x128xf32> to vector<2x128xf32>
    %cst_21 = arith.constant dense<0.000000e+00> : vector<2x128xf32>
    %69 = tpu.matmul %65, %3, %cst_21 {dimension_numbers = #tpu.dot_dimension_numbers<[1], [0], [0], [1], [0, 0, 1, 1], [], []>} : vector<2x32xf32>, vector<32x128xf32>, vector<2x128xf32> -> vector<2x128xf32>
    %70 = arith.addf %68, %69 : vector<2x128xf32>
    %71 = math.tanh %70 : vector<2x128xf32>
    %72 = arith.mulf %71, %9 : vector<2x128xf32>
    %73 = arith.addf %72, %12 : vector<2x128xf32>
    %74 = vector.extract_strided_slice %73 {offsets = [0, 0], sizes = [2, 32], strides = [1, 1]} : vector<2x128xf32> to vector<2x32xf32>
    %75 = vector.extract_strided_slice %73 {offsets = [0, 32], sizes = [2, 32], strides = [1, 1]} : vector<2x128xf32> to vector<2x32xf32>
    %76 = vector.extract_strided_slice %73 {offsets = [0, 64], sizes = [2, 32], strides = [1, 1]} : vector<2x128xf32> to vector<2x32xf32>
    %77 = vector.extract_strided_slice %73 {offsets = [0, 96], sizes = [2, 32], strides = [1, 1]} : vector<2x128xf32> to vector<2x32xf32>
    %78 = arith.mulf %75, %63 : vector<2x32xf32>
    %79 = arith.mulf %74, %77 : vector<2x32xf32>
    %80 = arith.addf %78, %79 : vector<2x32xf32>
    %81 = math.tanh %80 : vector<2x32xf32>
    %82 = arith.mulf %76, %81 : vector<2x32xf32>
    %c4_i32 = arith.constant 4 : i32
    %83 = arith.index_cast %c4_i32 : i32 to index
    %c0_22 = arith.constant 0 : index
    %c0_23 = arith.constant 0 : index
    %84 = vector.load %arg1[%83, %c0_22, %c0_23] : memref<8x2x128xf32, #tpu.memory_space<vmem>>, vector<1x2x128xf32>
    %85 = vector.shape_cast %84 : vector<1x2x128xf32> to vector<2x128xf32>
    %cst_24 = arith.constant dense<0.000000e+00> : vector<2x128xf32>
    %86 = tpu.matmul %82, %3, %cst_24 {dimension_numbers = #tpu.dot_dimension_numbers<[1], [0], [0], [1], [0, 0, 1, 1], [], []>} : vector<2x32xf32>, vector<32x128xf32>, vector<2x128xf32> -> vector<2x128xf32>
    %87 = arith.addf %85, %86 : vector<2x128xf32>
    %88 = math.tanh %87 : vector<2x128xf32>
    %89 = arith.mulf %88, %9 : vector<2x128xf32>
    %90 = arith.addf %89, %12 : vector<2x128xf32>
    %91 = vector.extract_strided_slice %90 {offsets = [0, 0], sizes = [2, 32], strides = [1, 1]} : vector<2x128xf32> to vector<2x32xf32>
    %92 = vector.extract_strided_slice %90 {offsets = [0, 32], sizes = [2, 32], strides = [1, 1]} : vector<2x128xf32> to vector<2x32xf32>
    %93 = vector.extract_strided_slice %90 {offsets = [0, 64], sizes = [2, 32], strides = [1, 1]} : vector<2x128xf32> to vector<2x32xf32>
    %94 = vector.extract_strided_slice %90 {offsets = [0, 96], sizes = [2, 32], strides = [1, 1]} : vector<2x128xf32> to vector<2x32xf32>
    %95 = arith.mulf %92, %80 : vector<2x32xf32>
    %96 = arith.mulf %91, %94 : vector<2x32xf32>
    %97 = arith.addf %95, %96 : vector<2x32xf32>
    %98 = math.tanh %97 : vector<2x32xf32>
    %99 = arith.mulf %93, %98 : vector<2x32xf32>
    %c5_i32 = arith.constant 5 : i32
    %100 = arith.index_cast %c5_i32 : i32 to index
    %c0_25 = arith.constant 0 : index
    %c0_26 = arith.constant 0 : index
    %101 = vector.load %arg1[%100, %c0_25, %c0_26] : memref<8x2x128xf32, #tpu.memory_space<vmem>>, vector<1x2x128xf32>
    %102 = vector.shape_cast %101 : vector<1x2x128xf32> to vector<2x128xf32>
    %cst_27 = arith.constant dense<0.000000e+00> : vector<2x128xf32>
    %103 = tpu.matmul %99, %3, %cst_27 {dimension_numbers = #tpu.dot_dimension_numbers<[1], [0], [0], [1], [0, 0, 1, 1], [], []>} : vector<2x32xf32>, vector<32x128xf32>, vector<2x128xf32> -> vector<2x128xf32>
    %104 = arith.addf %102, %103 : vector<2x128xf32>
    %105 = math.tanh %104 : vector<2x128xf32>
    %106 = arith.mulf %105, %9 : vector<2x128xf32>
    %107 = arith.addf %106, %12 : vector<2x128xf32>
    %108 = vector.extract_strided_slice %107 {offsets = [0, 0], sizes = [2, 32], strides = [1, 1]} : vector<2x128xf32> to vector<2x32xf32>
    %109 = vector.extract_strided_slice %107 {offsets = [0, 32], sizes = [2, 32], strides = [1, 1]} : vector<2x128xf32> to vector<2x32xf32>
    %110 = vector.extract_strided_slice %107 {offsets = [0, 64], sizes = [2, 32], strides = [1, 1]} : vector<2x128xf32> to vector<2x32xf32>
    %111 = vector.extract_strided_slice %107 {offsets = [0, 96], sizes = [2, 32], strides = [1, 1]} : vector<2x128xf32> to vector<2x32xf32>
    %112 = arith.mulf %109, %97 : vector<2x32xf32>
    %113 = arith.mulf %108, %111 : vector<2x32xf32>
    %114 = arith.addf %112, %113 : vector<2x32xf32>
    %115 = math.tanh %114 : vector<2x32xf32>
    %116 = arith.mulf %110, %115 : vector<2x32xf32>
    %c6_i32 = arith.constant 6 : i32
    %117 = arith.index_cast %c6_i32 : i32 to index
    %c0_28 = arith.constant 0 : index
    %c0_29 = arith.constant 0 : index
    %118 = vector.load %arg1[%117, %c0_28, %c0_29] : memref<8x2x128xf32, #tpu.memory_space<vmem>>, vector<1x2x128xf32>
    %119 = vector.shape_cast %118 : vector<1x2x128xf32> to vector<2x128xf32>
    %cst_30 = arith.constant dense<0.000000e+00> : vector<2x128xf32>
    %120 = tpu.matmul %116, %3, %cst_30 {dimension_numbers = #tpu.dot_dimension_numbers<[1], [0], [0], [1], [0, 0, 1, 1], [], []>} : vector<2x32xf32>, vector<32x128xf32>, vector<2x128xf32> -> vector<2x128xf32>
    %121 = arith.addf %119, %120 : vector<2x128xf32>
    %122 = math.tanh %121 : vector<2x128xf32>
    %123 = arith.mulf %122, %9 : vector<2x128xf32>
    %124 = arith.addf %123, %12 : vector<2x128xf32>
    %125 = vector.extract_strided_slice %124 {offsets = [0, 0], sizes = [2, 32], strides = [1, 1]} : vector<2x128xf32> to vector<2x32xf32>
    %126 = vector.extract_strided_slice %124 {offsets = [0, 32], sizes = [2, 32], strides = [1, 1]} : vector<2x128xf32> to vector<2x32xf32>
    %127 = vector.extract_strided_slice %124 {offsets = [0, 64], sizes = [2, 32], strides = [1, 1]} : vector<2x128xf32> to vector<2x32xf32>
    %128 = vector.extract_strided_slice %124 {offsets = [0, 96], sizes = [2, 32], strides = [1, 1]} : vector<2x128xf32> to vector<2x32xf32>
    %129 = arith.mulf %126, %114 : vector<2x32xf32>
    %130 = arith.mulf %125, %128 : vector<2x32xf32>
    %131 = arith.addf %129, %130 : vector<2x32xf32>
    %132 = math.tanh %131 : vector<2x32xf32>
    %133 = arith.mulf %127, %132 : vector<2x32xf32>
    %c7_i32 = arith.constant 7 : i32
    %134 = arith.index_cast %c7_i32 : i32 to index
    %c0_31 = arith.constant 0 : index
    %c0_32 = arith.constant 0 : index
    %135 = vector.load %arg1[%134, %c0_31, %c0_32] : memref<8x2x128xf32, #tpu.memory_space<vmem>>, vector<1x2x128xf32>
    %136 = vector.shape_cast %135 : vector<1x2x128xf32> to vector<2x128xf32>
    %cst_33 = arith.constant dense<0.000000e+00> : vector<2x128xf32>
    %137 = tpu.matmul %133, %3, %cst_33 {dimension_numbers = #tpu.dot_dimension_numbers<[1], [0], [0], [1], [0, 0, 1, 1], [], []>} : vector<2x32xf32>, vector<32x128xf32>, vector<2x128xf32> -> vector<2x128xf32>
    %138 = arith.addf %136, %137 : vector<2x128xf32>
    %139 = math.tanh %138 : vector<2x128xf32>
    %140 = arith.mulf %139, %9 : vector<2x128xf32>
    %141 = arith.addf %140, %12 : vector<2x128xf32>
    %142 = vector.extract_strided_slice %141 {offsets = [0, 0], sizes = [2, 32], strides = [1, 1]} : vector<2x128xf32> to vector<2x32xf32>
    %143 = vector.extract_strided_slice %141 {offsets = [0, 32], sizes = [2, 32], strides = [1, 1]} : vector<2x128xf32> to vector<2x32xf32>
    %144 = vector.extract_strided_slice %141 {offsets = [0, 64], sizes = [2, 32], strides = [1, 1]} : vector<2x128xf32> to vector<2x32xf32>
    %145 = vector.extract_strided_slice %141 {offsets = [0, 96], sizes = [2, 32], strides = [1, 1]} : vector<2x128xf32> to vector<2x32xf32>
    %146 = arith.mulf %143, %131 : vector<2x32xf32>
    %147 = arith.mulf %142, %145 : vector<2x32xf32>
    %148 = arith.addf %146, %147 : vector<2x32xf32>
    %149 = math.tanh %148 : vector<2x32xf32>
    %150 = arith.mulf %144, %149 : vector<2x32xf32>
    %c8_i32 = arith.constant 8 : i32
    %c0_34 = arith.constant 0 : index
    %c0_35 = arith.constant 0 : index
    %151 = vector.load %arg10[%c0_34, %c0_35] : memref<2x32xf32, #tpu.memory_space<vmem>>, vector<2x32xf32>
    tpu.vector_store %arg10[%c0_34, %c0_35], %150 {strides = array<i32>} : memref<2x32xf32, #tpu.memory_space<vmem>>, vector<2x32xf32>,
    %c0_36 = arith.constant 0 : index
    %c0_37 = arith.constant 0 : index
    %152 = vector.load %arg11[%c0_36, %c0_37] : memref<2x32xf32, #tpu.memory_space<vmem>>, vector<2x32xf32>
    tpu.vector_store %arg11[%c0_36, %c0_37], %148 {strides = array<i32>} : memref<2x32xf32, #tpu.memory_space<vmem>>, vector<2x32xf32>,
    %c0_i32_38 = arith.constant 0 : i32
    %153 = arith.cmpi eq, %arg0, %c0_i32_38 : i32
    %154 = arith.extui %153 : i1 to i32
    %c0_i32_39 = arith.constant 0 : i32
    %155 = arith.cmpi ne, %154, %c0_i32_39 : i32
    scf.if %155 {
      %c0_40 = arith.constant 0 : index
      %c0_41 = arith.constant 0 : index
      %156 = vector.load %arg5[%c0_40, %c0_41] : memref<32x128xf32, #tpu.memory_space<vmem>>, vector<32x128xf32>
      %cst_42 = arith.constant dense<0.000000e+00> : vector<2x128xf32>
      %157 = tpu.matmul %150, %156, %cst_42 {dimension_numbers = #tpu.dot_dimension_numbers<[1], [0], [0], [1], [0, 0, 1, 1], [], []>} : vector<2x32xf32>, vector<32x128xf32>, vector<2x128xf32> -> vector<2x128xf32>
      %c0_43 = arith.constant 0 : index
      %c0_44 = arith.constant 0 : index
      %158 = vector.load %arg6[%c0_43, %c0_44] : memref<1x128xf32, #tpu.memory_space<vmem>>, vector<1x128xf32>
      %159 = vector.broadcast %158 : vector<1x128xf32> to vector<2x128xf32>
      %160 = arith.addf %157, %159 : vector<2x128xf32>
      %c0_45 = arith.constant 0 : index
      %c0_46 = arith.constant 0 : index
      %161 = vector.load %arg7[%c0_45, %c0_46] : memref<2x128xf32, #tpu.memory_space<vmem>>, vector<2x128xf32>
      tpu.vector_store %arg7[%c0_45, %c0_46], %160 {strides = array<i32>} : memref<2x128xf32, #tpu.memory_space<vmem>>, vector<2x128xf32>,
      %c0_47 = arith.constant 0 : index
      %c0_48 = arith.constant 0 : index
      %162 = vector.load %arg8[%c0_47, %c0_48] : memref<2x32xf32, #tpu.memory_space<vmem>>, vector<2x32xf32>
      tpu.vector_store %arg8[%c0_47, %c0_48], %150 {strides = array<i32>} : memref<2x32xf32, #tpu.memory_space<vmem>>, vector<2x32xf32>,
      %c0_49 = arith.constant 0 : index
      %c0_50 = arith.constant 0 : index
      %163 = vector.load %arg9[%c0_49, %c0_50] : memref<2x32xf32, #tpu.memory_space<vmem>>, vector<2x32xf32>
      tpu.vector_store %arg9[%c0_49, %c0_50], %148 {strides = array<i32>} : memref<2x32xf32, #tpu.memory_space<vmem>>, vector<2x32xf32>,
    } else {
    }
    return
  }
  func.func @transform_0(%arg0: i32) -> (i32, i32, i32) {
    %c0_i32 = arith.constant 0 : i32
    %c0_i32_0 = arith.constant 0 : i32
    %c0_i32_1 = arith.constant 0 : i32
    return %arg0, %c0_i32, %c0_i32_0 : i32, i32, i32
  }
  func.func @transform_1(%arg0: i32) -> (i32, i32) {
    %c0_i32 = arith.constant 0 : i32
    %c0_i32_0 = arith.constant 0 : i32
    %c0_i32_1 = arith.constant 0 : i32
    return %c0_i32, %c0_i32_0 : i32, i32
  }
  func.func @transform_2(%arg0: i32) -> (i32, i32) {
    %c0_i32 = arith.constant 0 : i32
    %c0_i32_0 = arith.constant 0 : i32
    %c0_i32_1 = arith.constant 0 : i32
    return %c0_i32, %c0_i32_0 : i32, i32
  }
  func.func @transform_3(%arg0: i32) -> (i32, i32) {
    %c0_i32 = arith.constant 0 : i32
    %c0_i32_0 = arith.constant 0 : i32
    %c0_i32_1 = arith.constant 0 : i32
    return %c0_i32, %c0_i32_0 : i32, i32
  }
  func.func @transform_4(%arg0: i32) -> (i32, i32) {
    %c0_i32 = arith.constant 0 : i32
    %c0_i32_0 = arith.constant 0 : i32
    %c0_i32_1 = arith.constant 0 : i32
    return %c0_i32, %c0_i32_0 : i32, i32
  }
  func.func @transform_5(%arg0: i32) -> (i32, i32) {
    %c0_i32 = arith.constant 0 : i32
    %c0_i32_0 = arith.constant 0 : i32
    %c0_i32_1 = arith.constant 0 : i32
    return %c0_i32, %c0_i32_0 : i32, i32
  }
  func.func @transform_6(%arg0: i32) -> (i32, i32) {
    %c0_i32 = arith.constant 0 : i32
    %c0_i32_0 = arith.constant 0 : i32
    %c0_i32_1 = arith.constant 0 : i32
    return %c0_i32, %c0_i32_0 : i32, i32
  }
  func.func @transform_7(%arg0: i32) -> (i32, i32) {
    %c0_i32 = arith.constant 0 : i32
    %c0_i32_0 = arith.constant 0 : i32
    %c0_i32_1 = arith.constant 0 : i32
    return %c0_i32, %c0_i32_0 : i32, i32
  }
  func.func @transform_8(%arg0: i32) -> (i32, i32) {
    %c0_i32 = arith.constant 0 : i32
    %c0_i32_0 = arith.constant 0 : i32
    %c0_i32_1 = arith.constant 0 : i32
    return %c0_i32, %c0_i32_0 : i32, i32
  }
}

</mosaic_0001>

<llo_original>
// kernel: tpu_custom_call.1
$region0: #{tpu_custom_call.1}
  #allocation0 [shape = 'u32[]', space=smem, size = 0x4, offset = 0x4, fixed_abs, tag = 'smem constant byte address 0x4 - core index']
  #allocation1 [shape = 'u32[144,128]{1,0:T(1,128)}', space=vmem, size = 0x12000, scoped, tag = 'internal scratch']
  #allocation2 [shape = 'f32[2,32]{1,0:T(2,128)}', space=vmem, size = 0x400, scoped, tag = 'scratch operand']
  #allocation3 [shape = 'f32[2,32]{1,0:T(2,128)}', space=vmem, size = 0x400, scoped, tag = 'scratch operand']
  %s0 = inlined_call_operand.hbm [shape: f32[8,2,128], index: 0, kind: input, shape index: {}]
  %s1 = inlined_call_operand.vmem [shape: f32[2,32], index: 1, kind: input, shape index: {}]
  %s2 = inlined_call_operand.vmem [shape: f32[2,32], index: 2, kind: input, shape index: {}]
  %s3 = inlined_call_operand.hbm [shape: f32[32,128], index: 3, kind: input, shape index: {}]
  %s4 = inlined_call_operand.hbm [shape: f32[32,128], index: 4, kind: input, shape index: {}]
  %s5 = inlined_call_operand.vmem [shape: f32[1,128], index: 5, kind: input, shape index: {}]
  %s6 = inlined_call_operand.hbm [shape: f32[2,128], index: 6, kind: output, shape index: {0}]
  %s7 = inlined_call_operand.hbm [shape: f32[2,32], index: 7, kind: output, shape index: {1}]
  %s8 = inlined_call_operand.hbm [shape: f32[2,32], index: 8, kind: output, shape index: {2}]
  %9 = xla_tuple %s6, %s7, %s8
  %s10 = sld [smem:[#allocation0]]
  $region70: #{tpu_custom_call.1} parent=0
    _
  %s12 = ssub.s32 1, %s10
  %s13 = scalar_select 0, %s12, %s10
  $region1: #{tpu_custom_call.1} parent=0
    #allocation4 [shape = 'u8[8192]{0}', space=vmem, size = 0x2000, scoped, tag = 'input window, operand 0, single buffered']
    #allocation5 [shape = 's32[1]{0}', space=sflag, size = 0x4, scoped, tag = 'scoped memory for tpu_custom_call.1']
    #allocation6 [shape = 's32[1]{0}', space=sflag, size = 0x4, scoped, tag = 'scoped memory for tpu_custom_call.1']
    #allocation7 [shape = 'u8[16384]{0}', space=vmem, size = 0x4000, scoped, tag = 'input window, operand 3, single buffered']
    #allocation8 [shape = 's32[1]{0}', space=sflag, size = 0x4, scoped, tag = 'scoped memory for tpu_custom_call.1']
    #allocation9 [shape = 'u8[16384]{0}', space=vmem, size = 0x4000, scoped, tag = 'input window, operand 4, single buffered']
    #allocation10 [shape = 'u8[1024]{0}', space=vmem, size = 0x400, scoped, tag = 'output window, operand 0, single buffered']
    #allocation11 [shape = 'u8[1024]{0}', space=vmem, size = 0x400, scoped, tag = 'output window, operand 1, single buffered']
    #allocation12 [shape = 's32[1]{0}', space=sflag, size = 0x4, scoped, tag = 'scoped memory for tpu_custom_call.1']
    #allocation13 [shape = 'u8[1024]{0}', space=vmem, size = 0x400, scoped, tag = 'output window, operand 2, single buffered']
    %14 = vsyncpa [#allocation5], 0
    %15 = vsyncpa [#allocation8], 0
    %16 = vsyncpa [#allocation6], 0
    %17 = vsyncpa [#allocation12], 0
    // Predicated region
    $region2: #{tpu_custom_call.1} parent=1 // pred_check
      _
    $region3: #{tpu_custom_call.1} parent=1 // pred_check_branch
      %19 = sbr.rel (0) target = $region5
    $region4: #{tpu_custom_call.1} parent=1 // pred_region
      %s21 = ssub.s32 256, 256
      %22 = vsyncadd [#allocation5], %s21
      %s23 = sshll.u32 [#allocation4], 4
      %s24 = int_to_ptr.vmem [resolvable:$true] %s23
      %29 = dma.hbm_to_vmem [thread:$0]  %s0, 256, %s24, [#allocation5], 32, 32, 2
    $region5: #{tpu_custom_call.1} parent=1 // pred_fallthru
      _
    // Predicated region
    $region6: #{tpu_custom_call.1} parent=1 // pred_check
      _
    $region7: #{tpu_custom_call.1} parent=1 // pred_check_branch
      %31 = sbr.rel (0) target = $region9
    $region8: #{tpu_custom_call.1} parent=1 // pred_region
      _
    $region9: #{tpu_custom_call.1} parent=1 // pred_fallthru
      _
    // Predicated region
    $region10: #{tpu_custom_call.1} parent=1 // pred_check
      _
    $region11: #{tpu_custom_call.1} parent=1 // pred_check_branch
      %33 = sbr.rel (0) target = $region13
    $region12: #{tpu_custom_call.1} parent=1 // pred_region
      _
    $region13: #{tpu_custom_call.1} parent=1 // pred_fallthru
      _
    // Predicated region
    $region14: #{tpu_custom_call.1} parent=1 // pred_check
      _
    $region15: #{tpu_custom_call.1} parent=1 // pred_check_branch
      %35 = sbr.rel (0) target = $region17
    $region16: #{tpu_custom_call.1} parent=1 // pred_region
      %s37 = ssub.s32 512, 512
      %38 = vsyncadd [#allocation8], %s37
      %s39 = sshll.u32 [#allocation7], 4
      %s40 = int_to_ptr.vmem [resolvable:$true] %s39
      %45 = dma.hbm_to_vmem [thread:$0]  %s3, 512, %s40, [#allocation8], 128, 128, 8
    $region17: #{tpu_custom_call.1} parent=1 // pred_fallthru
      _
    // Predicated region
    $region18: #{tpu_custom_call.1} parent=1 // pred_check
      _
    $region19: #{tpu_custom_call.1} parent=1 // pred_check_branch
      %47 = sbr.rel (0) target = $region21
    $region20: #{tpu_custom_call.1} parent=1 // pred_region
      %s49 = ssub.s32 512, 512
      %50 = vsyncadd [#allocation8], %s49
      %s51 = sshll.u32 [#allocation9], 4
      %s52 = int_to_ptr.vmem [resolvable:$true] %s51
      %57 = dma.hbm_to_vmem [thread:$0]  %s4, 512, %s52, [#allocation8], 128, 128, 8
    $region21: #{tpu_custom_call.1} parent=1 // pred_fallthru
      _
    // Predicated region
    $region22: #{tpu_custom_call.1} parent=1 // pred_check
      _
    $region23: #{tpu_custom_call.1} parent=1 // pred_check_branch
      %59 = sbr.rel (0) target = $region25
    $region24: #{tpu_custom_call.1} parent=1 // pred_region
      _
    $region25: #{tpu_custom_call.1} parent=1 // pred_fallthru
      _
    // Predicated region
    $region26: #{tpu_custom_call.1} parent=1 // pred_check
      _
    $region27: #{tpu_custom_call.1} parent=1 // pred_check_branch
      %61 = sbr.rel (0) target = $region29
    $region28: #{tpu_custom_call.1} parent=1 // pred_region
      %62 = dma.done [#allocation5], 256
    $region29: #{tpu_custom_call.1} parent=1 // pred_fallthru
      _
    // Predicated region
    $region30: #{tpu_custom_call.1} parent=1 // pred_check
      _
    $region31: #{tpu_custom_call.1} parent=1 // pred_check_branch
      %64 = sbr.rel (0) target = $region33
    $region32: #{tpu_custom_call.1} parent=1 // pred_region
      %65 = dma.done [#allocation8], 512
    $region33: #{tpu_custom_call.1} parent=1 // pred_fallthru
      _
    // Predicated region
    $region34: #{tpu_custom_call.1} parent=1 // pred_check
      _
    $region35: #{tpu_custom_call.1} parent=1 // pred_check_branch
      %67 = sbr.rel (0) target = $region37
    $region36: #{tpu_custom_call.1} parent=1 // pred_region
      %68 = dma.done [#allocation8], 512
    $region37: #{tpu_custom_call.1} parent=1 // pred_fallthru
      _
    %p69 = scmp.eq.s32.totalorder 0, 0
    // Predicated region
    $region38: #{tpu_custom_call.1} parent=1 // pred_check
      %p70 = pneg %p69
    $region39: #{tpu_custom_call.1} parent=1 // pred_check_branch
      %72 = sbr.rel (%p70) target = $region41
    $region40: #{tpu_custom_call.1} parent=1 // pred_region
      %v73 = vld [vmem:[%s1] sm:$0x3]
      %vm74 = vcmask 254976
      %75 = vst.msk [vmem:[#allocation2] sm:$0x3] %vm74, %v73
      %v76 = vld [vmem:[%s2] sm:$0x3]
      %77 = vst.msk [vmem:[#allocation3] sm:$0x3] %vm74, %v76
    $region41: #{tpu_custom_call.1} parent=1 // pred_fallthru
      _
    %v78 = vld [vmem:[#allocation7] sm:$0xff]
    %v79 = vld [vmem:[#allocation7 + $0x8] sm:$0xff]
    %v80 = vld [vmem:[#allocation7 + $0x10] sm:$0xff]
    %v81 = vld [vmem:[#allocation7 + $0x18] sm:$0xff]
    %v82 = vlaneseq
    %v83 = vand.u32 %v82, 127
    %vm84 = vcmp.lt.s32.totalorder %v83, 96
    %v85 = vsel %vm84, 0.5, 1.0
    %v86 = vsel %vm84, 0.5, 0.0
    %v87 = vld [vmem:[#allocation2] sm:$0x3]
    %v88 = vld [vmem:[#allocation3] sm:$0x3]
    %v89 = vld [vmem:[#allocation4] sm:$0x3]
    %vm90 = vcmask 261120
    %v92 = vsel %vm90, %v87, 0
    %94 = vmatprep.subr.mxu0 0.0
    %95 = vmatpush1.msra.mxu0 %v78
    %96 = vmatprep.subr.mxu0 0.0
    %97 = vmatpush1.msra.mxu0 %v79
    %98 = vmatprep.subr.mxu0 0.0
    %99 = vmatpush1.msra.mxu0 %v80
    %100 = vmatprep.subr.mxu0 0.0
    %101 = vmatpush1.msra.mxu0 %v81
    %102 = vmatprep.subr.mxu0 0.0
    %103 = vmatpush1.msra.mxu0 0.0
    %104 = vmatprep.subr.mxu0 0.0
    %105 = vmatpush1.msra.mxu0 0.0
    %106 = vmatprep.subr.mxu0 0.0
    %107 = vmatpush1.msra.mxu0 0.0
    %108 = vmatprep.subr.mxu0 0.0
    %109 = vmatpush1.msra.mxu0 0.0
    %110 = vmatprep.subr.mxu0 0.0
    %111 = vmatpush1.msra.mxu0 0.0
    %112 = vmatprep.subr.mxu0 0.0
    %113 = vmatpush1.msra.mxu0 0.0
    %114 = vmatprep.subr.mxu0 0.0
    %115 = vmatpush1.msra.mxu0 0.0
    %116 = vmatprep.subr.mxu0 0.0
    %117 = vmatpush1.msra.mxu0 0.0
    %118 = vmatprep.subr.mxu0 0.0
    %119 = vmatpush1.msra.mxu0 0.0
    %120 = vmatprep.subr.mxu0 0.0
    %121 = vmatpush1.msra.mxu0 0.0
    %122 = vmatprep.subr.mxu0 0.0
    %123 = vmatpush1.msra.mxu0 0.0
    %124 = vmatprep.subr.mxu0 0.0
    %125 = vmatpush1.msra.mxu0 0.0
    %126 = vmatprep.subr.mxu0 0.0
    %127 = vmatpush1.msra.mxu0 0.0
    %128 = vmatprep.subr.mxu0 0.0
    %129 = vmatpush1.msra.mxu0 0.0
    %130 = vmatprep.subr.mxu0 0.0
    %131 = vmatpush1.msra.mxu0 0.0
    %132 = vmatprep.subr.mxu0 0.0
    %133 = vmatpush1.msra.mxu0 0.0
    %134 = vmatprep.subr.mxu0 0.0
    %135 = vmatpush1.msra.mxu0 0.0
    %136 = vmatprep.subr.mxu0 0.0
    %137 = vmatpush1.msra.mxu0 0.0
    %138 = vmatprep.subr.mxu0 0.0
    %139 = vmatpush1.msra.mxu0 0.0
    %140 = vmatprep.subr.mxu0 0.0
    %141 = vmatpush1.msra.mxu0 0.0
    %142 = vmatprep.subr.mxu0 0.0
    %143 = vmatpush1.msra.mxu0 0.0
    %144 = vmatprep.subr.mxu0 0.0
    %145 = vmatpush1.msra.mxu0 0.0
    %146 = vmatprep.subr.mxu0 0.0
    %147 = vmatpush1.msra.mxu0 0.0
    %148 = vmatprep.subr.mxu0 0.0
    %149 = vmatpush1.msra.mxu0 0.0
    %150 = vmatprep.subr.mxu0 0.0
    %151 = vmatpush1.msra.mxu0 0.0
    %152 = vmatprep.subr.mxu0 0.0
    %153 = vmatpush1.msra.mxu0 0.0
    %154 = vmatprep.subr.mxu0 0.0
    %155 = vmatpush1.msra.mxu0 0.0
    %156 = vmatprep.subr.mxu0 0.0
    %157 = vmatpush1.msra.mxu0 0.0
    %158 = vmatprep.mubr.f32.mxu0 0.0
    %159 = vmatmul.mubr.f32.gmra.mrb[0].mxu0 %v92
    %v160 = vpop.f32.mrb[0].mxu0
    %v161 = vadd.f32 0.0, %v160
    %v162 = vpop.f32.mrb[0].mxu0
    %163 = vdwg.mxu0
    %v164 = vadd.f32 %v89, %v161
    %v165 = vtanh.pop %v164
    %v166 = vmul.f32 %v165, %v85
    %v167 = vadd.f32 %v166, %v86
    %169 = vrot.lane.b32.xlu0 %v88, 32
    %v170 = vpop.permute.xlu0 %169
    %v172 = vmul.f32 %v167, %v170
    %174 = vrot.lane.b32.xlu0 %v167, 32
    %v175 = vpop.permute.xlu0 %174
    %v177 = vmul.f32 %v167, %v175
    %179 = vrot.lane.b32.xlu0 %v177, 32
    %v180 = vpop.permute.xlu0 %179
    %v182 = vadd.f32 %v172, %v180
    %v183 = vtanh.pop %v182
    %185 = vrot.lane.b32.xlu0 %v183, 32
    %v186 = vpop.permute.xlu0 %185
    %v188 = vmul.f32 %v167, %v186
    %s189 = scalar_lea.vmem [#allocation4], 2
    %v190 = vld [vmem:[%s189] sm:$0x3]
    %192 = vrot.lane.b32.xlu0 %v188, 64
    %v193 = vpop.permute.xlu0 %192
    %v194 = vsel %vm90, %v193, 0
    %196 = vmatprep.subr.mxu0 0.0
    %197 = vmatpush1.msra.mxu0 %v78
    %198 = vmatprep.subr.mxu0 0.0
    %199 = vmatpush1.msra.mxu0 %v79
    %200 = vmatprep.subr.mxu0 0.0
    %201 = vmatpush1.msra.mxu0 %v80
    %202 = vmatprep.subr.mxu0 0.0
    %203 = vmatpush1.msra.mxu0 %v81
    %204 = vmatprep.subr.mxu0 0.0
    %205 = vmatpush1.msra.mxu0 0.0
    %206 = vmatprep.subr.mxu0 0.0
    %207 = vmatpush1.msra.mxu0 0.0
    %208 = vmatprep.subr.mxu0 0.0
    %209 = vmatpush1.msra.mxu0 0.0
    %210 = vmatprep.subr.mxu0 0.0
    %211 = vmatpush1.msra.mxu0 0.0
    %212 = vmatprep.subr.mxu0 0.0
    %213 = vmatpush1.msra.mxu0 0.0
    %214 = vmatprep.subr.mxu0 0.0
    %215 = vmatpush1.msra.mxu0 0.0
    %216 = vmatprep.subr.mxu0 0.0
    %217 = vmatpush1.msra.mxu0 0.0
    %218 = vmatprep.subr.mxu0 0.0
    %219 = vmatpush1.msra.mxu0 0.0
    %220 = vmatprep.subr.mxu0 0.0
    %221 = vmatpush1.msra.mxu0 0.0
    %222 = vmatprep.subr.mxu0 0.0
    %223 = vmatpush1.msra.mxu0 0.0
    %224 = vmatprep.subr.mxu0 0.0
    %225 = vmatpush1.msra.mxu0 0.0
    %226 = vmatprep.subr.mxu0 0.0
    %227 = vmatpush1.msra.mxu0 0.0
    %228 = vmatprep.subr.mxu0 0.0
    %229 = vmatpush1.msra.mxu0 0.0
    %230 = vmatprep.subr.mxu0 0.0
    %231 = vmatpush1.msra.mxu0 0.0
    %232 = vmatprep.subr.mxu0 0.0
    %233 = vmatpush1.msra.mxu0 0.0
    %234 = vmatprep.subr.mxu0 0.0
    %235 = vmatpush1.msra.mxu0 0.0
    %236 = vmatprep.subr.mxu0 0.0
    %237 = vmatpush1.msra.mxu0 0.0
    %238 = vmatprep.subr.mxu0 0.0
    %239 = vmatpush1.msra.mxu0 0.0
    %240 = vmatprep.subr.mxu0 0.0
    %241 = vmatpush1.msra.mxu0 0.0
    %242 = vmatprep.subr.mxu0 0.0
    %243 = vmatpush1.msra.mxu0 0.0
    %244 = vmatprep.subr.mxu0 0.0
    %245 = vmatpush1.msra.mxu0 0.0
    %246 = vmatprep.subr.mxu0 0.0
    %247 = vmatpush1.msra.mxu0 0.0
    %248 = vmatprep.subr.mxu0 0.0
    %249 = vmatpush1.msra.mxu0 0.0
    %250 = vmatprep.subr.mxu0 0.0
    %251 = vmatpush1.msra.mxu0 0.0
    %252 = vmatprep.subr.mxu0 0.0
    %253 = vmatpush1.msra.mxu0 0.0
    %254 = vmatprep.subr.mxu0 0.0
    %255 = vmatpush1.msra.mxu0 0.0
    %256 = vmatprep.subr.mxu0 0.0
    %257 = vmatpush1.msra.mxu0 0.0
    %258 = vmatprep.subr.mxu0 0.0
    %259 = vmatpush1.msra.mxu0 0.0
    %260 = vmatprep.mubr.f32.mxu0 0.0
    %261 = vmatmul.mubr.f32.gmra.mrb[0].mxu0 %v194
    %v262 = vpop.f32.mrb[0].mxu0
    %v263 = vadd.f32 0.0, %v262
    %v264 = vpop.f32.mrb[0].mxu0
    %265 = vdwg.mxu0
    %v266 = vadd.f32 %v190, %v263
    %v267 = vtanh.pop %v266
    %v268 = vmul.f32 %v267, %v85
    %v269 = vadd.f32 %v268, %v86
    %v270 = vmul.f32 %v269, %v182
    %272 = vrot.lane.b32.xlu0 %v269, 32
    %v273 = vpop.permute.xlu0 %272
    %v275 = vmul.f32 %v269, %v273
    %277 = vrot.lane.b32.xlu0 %v275, 32
    %v278 = vpop.permute.xlu0 %277
    %v280 = vadd.f32 %v270, %v278
    %v281 = vtanh.pop %v280
    %283 = vrot.lane.b32.xlu0 %v281, 32
    %v284 = vpop.permute.xlu0 %283
    %v286 = vmul.f32 %v269, %v284
    %s287 = scalar_lea.vmem [#allocation4], 4
    %v288 = vld [vmem:[%s287] sm:$0x3]
    %290 = vrot.lane.b32.xlu0 %v286, 64
    %v291 = vpop.permute.xlu0 %290
    %v292 = vsel %vm90, %v291, 0
    %294 = vmatprep.subr.mxu0 0.0
    %295 = vmatpush1.msra.mxu0 %v78
    %296 = vmatprep.subr.mxu0 0.0
    %297 = vmatpush1.msra.mxu0 %v79
    %298 = vmatprep.subr.mxu0 0.0
    %299 = vmatpush1.msra.mxu0 %v80
    %300 = vmatprep.subr.mxu0 0.0
    %301 = vmatpush1.msra.mxu0 %v81
    %302 = vmatprep.subr.mxu0 0.0
    %303 = vmatpush1.msra.mxu0 0.0
    %304 = vmatprep.subr.mxu0 0.0
    %305 = vmatpush1.msra.mxu0 0.0
    %306 = vmatprep.subr.mxu0 0.0
    %307 = vmatpush1.msra.mxu0 0.0
    %308 = vmatprep.subr.mxu0 0.0
    %309 = vmatpush1.msra.mxu0 0.0
    %310 = vmatprep.subr.mxu0 0.0
    %311 = vmatpush1.msra.mxu0 0.0
    %312 = vmatprep.subr.mxu0 0.0
    %313 = vmatpush1.msra.mxu0 0.0
    %314 = vmatprep.subr.mxu0 0.0
    %315 = vmatpush1.msra.mxu0 0.0
    %316 = vmatprep.subr.mxu0 0.0
    %317 = vmatpush1.msra.mxu0 0.0
    %318 = vmatprep.subr.mxu0 0.0
    %319 = vmatpush1.msra.mxu0 0.0
    %320 = vmatprep.subr.mxu0 0.0
    %321 = vmatpush1.msra.mxu0 0.0
    %322 = vmatprep.subr.mxu0 0.0
    %323 = vmatpush1.msra.mxu0 0.0
    %324 = vmatprep.subr.mxu0 0.0
    %325 = vmatpush1.msra.mxu0 0.0
    %326 = vmatprep.subr.mxu0 0.0
    %327 = vmatpush1.msra.mxu0 0.0
    %328 = vmatprep.subr.mxu0 0.0
    %329 = vmatpush1.msra.mxu0 0.0
    %330 = vmatprep.subr.mxu0 0.0
    %331 = vmatpush1.msra.mxu0 0.0
    %332 = vmatprep.subr.mxu0 0.0
    %333 = vmatpush1.msra.mxu0 0.0
    %334 = vmatprep.subr.mxu0 0.0
    %335 = vmatpush1.msra.mxu0 0.0
    %336 = vmatprep.subr.mxu0 0.0
    %337 = vmatpush1.msra.mxu0 0.0
    %338 = vmatprep.subr.mxu0 0.0
    %339 = vmatpush1.msra.mxu0 0.0
    %340 = vmatprep.subr.mxu0 0.0
    %341 = vmatpush1.msra.mxu0 0.0
    %342 = vmatprep.subr.mxu0 0.0
    %343 = vmatpush1.msra.mxu0 0.0
    %344 = vmatprep.subr.mxu0 0.0
    %345 = vmatpush1.msra.mxu0 0.0
    %346 = vmatprep.subr.mxu0 0.0
    %347 = vmatpush1.msra.mxu0 0.0
    %348 = vmatprep.subr.mxu0 0.0
    %349 = vmatpush1.msra.mxu0 0.0
    %350 = vmatprep.subr.mxu0 0.0
    %351 = vmatpush1.msra.mxu0 0.0
    %352 = vmatprep.subr.mxu0 0.0
    %353 = vmatpush1.msra.mxu0 0.0
    %354 = vmatprep.subr.mxu0 0.0
    %355 = vmatpush1.msra.mxu0 0.0
    %356 = vmatprep.subr.mxu0 0.0
    %357 = vmatpush1.msra.mxu0 0.0
    %358 = vmatprep.mubr.f32.mxu0 0.0
    %359 = vmatmul.mubr.f32.gmra.mrb[0].mxu0 %v292
    %v360 = vpop.f32.mrb[0].mxu0
    %v361 = vadd.f32 0.0, %v360
    %v362 = vpop.f32.mrb[0].mxu0
    %363 = vdwg.mxu0
    %v364 = vadd.f32 %v288, %v361
    %v365 = vtanh.pop %v364
    %v366 = vmul.f32 %v365, %v85
    %v367 = vadd.f32 %v366, %v86
    %v368 = vmul.f32 %v367, %v280
    %370 = vrot.lane.b32.xlu0 %v367, 32
    %v371 = vpop.permute.xlu0 %370
    %v373 = vmul.f32 %v367, %v371
    %375 = vrot.lane.b32.xlu0 %v373, 32
    %v376 = vpop.permute.xlu0 %375
    %v378 = vadd.f32 %v368, %v376
    %v379 = vtanh.pop %v378
    %381 = vrot.lane.b32.xlu0 %v379, 32
    %v382 = vpop.permute.xlu0 %381
    %v384 = vmul.f32 %v367, %v382
    %s385 = scalar_lea.vmem [#allocation4], 6
    %v386 = vld [vmem:[%s385] sm:$0x3]
    %388 = vrot.lane.b32.xlu0 %v384, 64
    %v389 = vpop.permute.xlu0 %388
    %v390 = vsel %vm90, %v389, 0
    %392 = vmatprep.subr.mxu0 0.0
    %393 = vmatpush1.msra.mxu0 %v78
    %394 = vmatprep.subr.mxu0 0.0
    %395 = vmatpush1.msra.mxu0 %v79
    %396 = vmatprep.subr.mxu0 0.0
    %397 = vmatpush1.msra.mxu0 %v80
    %398 = vmatprep.subr.mxu0 0.0
    %399 = vmatpush1.msra.mxu0 %v81
    %400 = vmatprep.subr.mxu0 0.0
    %401 = vmatpush1.msra.mxu0 0.0
    %402 = vmatprep.subr.mxu0 0.0
    %403 = vmatpush1.msra.mxu0 0.0
    %404 = vmatprep.subr.mxu0 0.0
    %405 = vmatpush1.msra.mxu0 0.0
    %406 = vmatprep.subr.mxu0 0.0
    %407 = vmatpush1.msra.mxu0 0.0
    %408 = vmatprep.subr.mxu0 0.0
    %409 = vmatpush1.msra.mxu0 0.0
    %410 = vmatprep.subr.mxu0 0.0
    %411 = vmatpush1.msra.mxu0 0.0
    %412 = vmatprep.subr.mxu0 0.0
    %413 = vmatpush1.msra.mxu0 0.0
    %414 = vmatprep.subr.mxu0 0.0
    %415 = vmatpush1.msra.mxu0 0.0
    %416 = vmatprep.subr.mxu0 0.0
    %417 = vmatpush1.msra.mxu0 0.0
    %418 = vmatprep.subr.mxu0 0.0
    %419 = vmatpush1.msra.mxu0 0.0
    %420 = vmatprep.subr.mxu0 0.0
    %421 = vmatpush1.msra.mxu0 0.0
    %422 = vmatprep.subr.mxu0 0.0
    %423 = vmatpush1.msra.mxu0 0.0
    %424 = vmatprep.subr.mxu0 0.0
    %425 = vmatpush1.msra.mxu0 0.0
    %426 = vmatprep.subr.mxu0 0.0
    %427 = vmatpush1.msra.mxu0 0.0
    %428 = vmatprep.subr.mxu0 0.0
    %429 = vmatpush1.msra.mxu0 0.0
    %430 = vmatprep.subr.mxu0 0.0
    %431 = vmatpush1.msra.mxu0 0.0
    %432 = vmatprep.subr.mxu0 0.0
    %433 = vmatpush1.msra.mxu0 0.0
    %434 = vmatprep.subr.mxu0 0.0
    %435 = vmatpush1.msra.mxu0 0.0
    %436 = vmatprep.subr.mxu0 0.0
    %437 = vmatpush1.msra.mxu0 0.0
    %438 = vmatprep.subr.mxu0 0.0
    %439 = vmatpush1.msra.mxu0 0.0
    %440 = vmatprep.subr.mxu0 0.0
    %441 = vmatpush1.msra.mxu0 0.0
    %442 = vmatprep.subr.mxu0 0.0
    %443 = vmatpush1.msra.mxu0 0.0
    %444 = vmatprep.subr.mxu0 0.0
    %445 = vmatpush1.msra.mxu0 0.0
    %446 = vmatprep.subr.mxu0 0.0
    %447 = vmatpush1.msra.mxu0 0.0
    %448 = vmatprep.subr.mxu0 0.0
    %449 = vmatpush1.msra.mxu0 0.0
    %450 = vmatprep.subr.mxu0 0.0
    %451 = vmatpush1.msra.mxu0 0.0
    %452 = vmatprep.subr.mxu0 0.0
    %453 = vmatpush1.msra.mxu0 0.0
    %454 = vmatprep.subr.mxu0 0.0
    %455 = vmatpush1.msra.mxu0 0.0
    %456 = vmatprep.mubr.f32.mxu0 0.0
    %457 = vmatmul.mubr.f32.gmra.mrb[0].mxu0 %v390
    %v458 = vpop.f32.mrb[0].mxu0
    %v459 = vadd.f32 0.0, %v458
    %v460 = vpop.f32.mrb[0].mxu0
    %461 = vdwg.mxu0
    %v462 = vadd.f32 %v386, %v459
    %v463 = vtanh.pop %v462
    %v464 = vmul.f32 %v463, %v85
    %v465 = vadd.f32 %v464, %v86
    %v466 = vmul.f32 %v465, %v378
    %468 = vrot.lane.b32.xlu0 %v465, 32
    %v469 = vpop.permute.xlu0 %468
    %v471 = vmul.f32 %v465, %v469
    %473 = vrot.lane.b32.xlu0 %v471, 32
    %v474 = vpop.permute.xlu0 %473
    %v476 = vadd.f32 %v466, %v474
    %v477 = vtanh.pop %v476
    %479 = vrot.lane.b32.xlu0 %v477, 32
    %v480 = vpop.permute.xlu0 %479
    %v482 = vmul.f32 %v465, %v480
    %s483 = scalar_lea.vmem [#allocation4], 8
    %v484 = vld [vmem:[%s483] sm:$0x3]
    %486 = vrot.lane.b32.xlu0 %v482, 64
    %v487 = vpop.permute.xlu0 %486
    %v488 = vsel %vm90, %v487, 0
    %490 = vmatprep.subr.mxu0 0.0
    %491 = vmatpush1.msra.mxu0 %v78
    %492 = vmatprep.subr.mxu0 0.0
    %493 = vmatpush1.msra.mxu0 %v79
    %494 = vmatprep.subr.mxu0 0.0
    %495 = vmatpush1.msra.mxu0 %v80
    %496 = vmatprep.subr.mxu0 0.0
    %497 = vmatpush1.msra.mxu0 %v81
    %498 = vmatprep.subr.mxu0 0.0
    %499 = vmatpush1.msra.mxu0 0.0
    %500 = vmatprep.subr.mxu0 0.0
    %501 = vmatpush1.msra.mxu0 0.0
    %502 = vmatprep.subr.mxu0 0.0
    %503 = vmatpush1.msra.mxu0 0.0
    %504 = vmatprep.subr.mxu0 0.0
    %505 = vmatpush1.msra.mxu0 0.0
    %506 = vmatprep.subr.mxu0 0.0
    %507 = vmatpush1.msra.mxu0 0.0
    %508 = vmatprep.subr.mxu0 0.0
    %509 = vmatpush1.msra.mxu0 0.0
    %510 = vmatprep.subr.mxu0 0.0
    %511 = vmatpush1.msra.mxu0 0.0
    %512 = vmatprep.subr.mxu0 0.0
    %513 = vmatpush1.msra.mxu0 0.0
    %514 = vmatprep.subr.mxu0 0.0
    %515 = vmatpush1.msra.mxu0 0.0
    %516 = vmatprep.subr.mxu0 0.0
    %517 = vmatpush1.msra.mxu0 0.0
    %518 = vmatprep.subr.mxu0 0.0
    %519 = vmatpush1.msra.mxu0 0.0
    %520 = vmatprep.subr.mxu0 0.0
    %521 = vmatpush1.msra.mxu0 0.0
    %522 = vmatprep.subr.mxu0 0.0
    %523 = vmatpush1.msra.mxu0 0.0
    %524 = vmatprep.subr.mxu0 0.0
    %525 = vmatpush1.msra.mxu0 0.0
    %526 = vmatprep.subr.mxu0 0.0
    %527 = vmatpush1.msra.mxu0 0.0
    %528 = vmatprep.subr.mxu0 0.0
    %529 = vmatpush1.msra.mxu0 0.0
    %530 = vmatprep.subr.mxu0 0.0
    %531 = vmatpush1.msra.mxu0 0.0
    %532 = vmatprep.subr.mxu0 0.0
    %533 = vmatpush1.msra.mxu0 0.0
    %534 = vmatprep.subr.mxu0 0.0
    %535 = vmatpush1.msra.mxu0 0.0
    %536 = vmatprep.subr.mxu0 0.0
    %537 = vmatpush1.msra.mxu0 0.0
    %538 = vmatprep.subr.mxu0 0.0
    %539 = vmatpush1.msra.mxu0 0.0
    %540 = vmatprep.subr.mxu0 0.0
    %541 = vmatpush1.msra.mxu0 0.0
    %542 = vmatprep.subr.mxu0 0.0
    %543 = vmatpush1.msra.mxu0 0.0
    %544 = vmatprep.subr.mxu0 0.0
    %545 = vmatpush1.msra.mxu0 0.0
    %546 = vmatprep.subr.mxu0 0.0
    %547 = vmatpush1.msra.mxu0 0.0
    %548 = vmatprep.subr.mxu0 0.0
    %549 = vmatpush1.msra.mxu0 0.0
    %550 = vmatprep.subr.mxu0 0.0
    %551 = vmatpush1.msra.mxu0 0.0
    %552 = vmatprep.subr.mxu0 0.0
    %553 = vmatpush1.msra.mxu0 0.0
    %554 = vmatprep.mubr.f32.mxu0 0.0
    %555 = vmatmul.mubr.f32.gmra.mrb[0].mxu0 %v488
    %v556 = vpop.f32.mrb[0].mxu0
    %v557 = vadd.f32 0.0, %v556
    %v558 = vpop.f32.mrb[0].mxu0
    %559 = vdwg.mxu0
    %v560 = vadd.f32 %v484, %v557
    %v561 = vtanh.pop %v560
    %v562 = vmul.f32 %v561, %v85
    %v563 = vadd.f32 %v562, %v86
    %v564 = vmul.f32 %v563, %v476
    %566 = vrot.lane.b32.xlu0 %v563, 32
    %v567 = vpop.permute.xlu0 %566
    %v569 = vmul.f32 %v563, %v567
    %571 = vrot.lane.b32.xlu0 %v569, 32
    %v572 = vpop.permute.xlu0 %571
    %v574 = vadd.f32 %v564, %v572
    %v575 = vtanh.pop %v574
    %577 = vrot.lane.b32.xlu0 %v575, 32
    %v578 = vpop.permute.xlu0 %577
    %v580 = vmul.f32 %v563, %v578
    %s581 = scalar_lea.vmem [#allocation4], 10
    %v582 = vld [vmem:[%s581] sm:$0x3]
    %584 = vrot.lane.b32.xlu0 %v580, 64
    %v585 = vpop.permute.xlu0 %584
    %v586 = vsel %vm90, %v585, 0
    %588 = vmatprep.subr.mxu0 0.0
    %589 = vmatpush1.msra.mxu0 %v78
    %590 = vmatprep.subr.mxu0 0.0
    %591 = vmatpush1.msra.mxu0 %v79
    %592 = vmatprep.subr.mxu0 0.0
    %593 = vmatpush1.msra.mxu0 %v80
    %594 = vmatprep.subr.mxu0 0.0
    %595 = vmatpush1.msra.mxu0 %v81
    %596 = vmatprep.subr.mxu0 0.0
    %597 = vmatpush1.msra.mxu0 0.0
    %598 = vmatprep.subr.mxu0 0.0
    %599 = vmatpush1.msra.mxu0 0.0
    %600 = vmatprep.subr.mxu0 0.0
    %601 = vmatpush1.msra.mxu0 0.0
    %602 = vmatprep.subr.mxu0 0.0
    %603 = vmatpush1.msra.mxu0 0.0
    %604 = vmatprep.subr.mxu0 0.0
    %605 = vmatpush1.msra.mxu0 0.0
    %606 = vmatprep.subr.mxu0 0.0
    %607 = vmatpush1.msra.mxu0 0.0
    %608 = vmatprep.subr.mxu0 0.0
    %609 = vmatpush1.msra.mxu0 0.0
    %610 = vmatprep.subr.mxu0 0.0
    %611 = vmatpush1.msra.mxu0 0.0
    %612 = vmatprep.subr.mxu0 0.0
    %613 = vmatpush1.msra.mxu0 0.0
    %614 = vmatprep.subr.mxu0 0.0
    %615 = vmatpush1.msra.mxu0 0.0
    %616 = vmatprep.subr.mxu0 0.0
    %617 = vmatpush1.msra.mxu0 0.0
    %618 = vmatprep.subr.mxu0 0.0
    %619 = vmatpush1.msra.mxu0 0.0
    %620 = vmatprep.subr.mxu0 0.0
    %621 = vmatpush1.msra.mxu0 0.0
    %622 = vmatprep.subr.mxu0 0.0
    %623 = vmatpush1.msra.mxu0 0.0
    %624 = vmatprep.subr.mxu0 0.0
    %625 = vmatpush1.msra.mxu0 0.0
    %626 = vmatprep.subr.mxu0 0.0
    %627 = vmatpush1.msra.mxu0 0.0
    %628 = vmatprep.subr.mxu0 0.0
    %629 = vmatpush1.msra.mxu0 0.0
    %630 = vmatprep.subr.mxu0 0.0
    %631 = vmatpush1.msra.mxu0 0.0
    %632 = vmatprep.subr.mxu0 0.0
    %633 = vmatpush1.msra.mxu0 0.0
    %634 = vmatprep.subr.mxu0 0.0
    %635 = vmatpush1.msra.mxu0 0.0
    %636 = vmatprep.subr.mxu0 0.0
    %637 = vmatpush1.msra.mxu0 0.0
    %638 = vmatprep.subr.mxu0 0.0
    %639 = vmatpush1.msra.mxu0 0.0
    %640 = vmatprep.subr.mxu0 0.0
    %641 = vmatpush1.msra.mxu0 0.0
    %642 = vmatprep.subr.mxu0 0.0
    %643 = vmatpush1.msra.mxu0 0.0
    %644 = vmatprep.subr.mxu0 0.0
    %645 = vmatpush1.msra.mxu0 0.0
    %646 = vmatprep.subr.mxu0 0.0
    %647 = vmatpush1.msra.mxu0 0.0
    %648 = vmatprep.subr.mxu0 0.0
    %649 = vmatpush1.msra.mxu0 0.0
    %650 = vmatprep.subr.mxu0 0.0
    %651 = vmatpush1.msra.mxu0 0.0
    %652 = vmatprep.mubr.f32.mxu0 0.0
    %653 = vmatmul.mubr.f32.gmra.mrb[0].mxu0 %v586
    %v654 = vpop.f32.mrb[0].mxu0
    %v655 = vadd.f32 0.0, %v654
    %v656 = vpop.f32.mrb[0].mxu0
    %657 = vdwg.mxu0
    %v658 = vadd.f32 %v582, %v655
    %v659 = vtanh.pop %v658
    %v660 = vmul.f32 %v659, %v85
    %v661 = vadd.f32 %v660, %v86
    %v662 = vmul.f32 %v661, %v574
    %664 = vrot.lane.b32.xlu0 %v661, 32
    %v665 = vpop.permute.xlu0 %664
    %v667 = vmul.f32 %v661, %v665
    %669 = vrot.lane.b32.xlu0 %v667, 32
    %v670 = vpop.permute.xlu0 %669
    %v672 = vadd.f32 %v662, %v670
    %v673 = vtanh.pop %v672
    %675 = vrot.lane.b32.xlu0 %v673, 32
    %v676 = vpop.permute.xlu0 %675
    %v678 = vmul.f32 %v661, %v676
    %s679 = scalar_lea.vmem [#allocation4], 12
    %v680 = vld [vmem:[%s679] sm:$0x3]
    %682 = vrot.lane.b32.xlu0 %v678, 64
    %v683 = vpop.permute.xlu0 %682
    %v684 = vsel %vm90, %v683, 0
    %686 = vmatprep.subr.mxu0 0.0
    %687 = vmatpush1.msra.mxu0 %v78
    %688 = vmatprep.subr.mxu0 0.0
    %689 = vmatpush1.msra.mxu0 %v79
    %690 = vmatprep.subr.mxu0 0.0
    %691 = vmatpush1.msra.mxu0 %v80
    %692 = vmatprep.subr.mxu0 0.0
    %693 = vmatpush1.msra.mxu0 %v81
    %694 = vmatprep.subr.mxu0 0.0
    %695 = vmatpush1.msra.mxu0 0.0
    %696 = vmatprep.subr.mxu0 0.0
    %697 = vmatpush1.msra.mxu0 0.0
    %698 = vmatprep.subr.mxu0 0.0
    %699 = vmatpush1.msra.mxu0 0.0
    %700 = vmatprep.subr.mxu0 0.0
    %701 = vmatpush1.msra.mxu0 0.0
    %702 = vmatprep.subr.mxu0 0.0
    %703 = vmatpush1.msra.mxu0 0.0
    %704 = vmatprep.subr.mxu0 0.0
    %705 = vmatpush1.msra.mxu0 0.0
    %706 = vmatprep.subr.mxu0 0.0
    %707 = vmatpush1.msra.mxu0 0.0
    %708 = vmatprep.subr.mxu0 0.0
    %709 = vmatpush1.msra.mxu0 0.0
    %710 = vmatprep.subr.mxu0 0.0
    %711 = vmatpush1.msra.mxu0 0.0
    %712 = vmatprep.subr.mxu0 0.0
    %713 = vmatpush1.msra.mxu0 0.0
    %714 = vmatprep.subr.mxu0 0.0
    %715 = vmatpush1.msra.mxu0 0.0
    %716 = vmatprep.subr.mxu0 0.0
    %717 = vmatpush1.msra.mxu0 0.0
    %718 = vmatprep.subr.mxu0 0.0
    %719 = vmatpush1.msra.mxu0 0.0
    %720 = vmatprep.subr.mxu0 0.0
    %721 = vmatpush1.msra.mxu0 0.0
    %722 = vmatprep.subr.mxu0 0.0
    %723 = vmatpush1.msra.mxu0 0.0
    %724 = vmatprep.subr.mxu0 0.0
    %725 = vmatpush1.msra.mxu0 0.0
    %726 = vmatprep.subr.mxu0 0.0
    %727 = vmatpush1.msra.mxu0 0.0
    %728 = vmatprep.subr.mxu0 0.0
    %729 = vmatpush1.msra.mxu0 0.0
    %730 = vmatprep.subr.mxu0 0.0
    %731 = vmatpush1.msra.mxu0 0.0
    %732 = vmatprep.subr.mxu0 0.0
    %733 = vmatpush1.msra.mxu0 0.0
    %734 = vmatprep.subr.mxu0 0.0
    %735 = vmatpush1.msra.mxu0 0.0
    %736 = vmatprep.subr.mxu0 0.0
    %737 = vmatpush1.msra.mxu0 0.0
    %738 = vmatprep.subr.mxu0 0.0
    %739 = vmatpush1.msra.mxu0 0.0
    %740 = vmatprep.subr.mxu0 0.0
    %741 = vmatpush1.msra.mxu0 0.0
    %742 = vmatprep.subr.mxu0 0.0
    %743 = vmatpush1.msra.mxu0 0.0
    %744 = vmatprep.subr.mxu0 0.0
    %745 = vmatpush1.msra.mxu0 0.0
    %746 = vmatprep.subr.mxu0 0.0
    %747 = vmatpush1.msra.mxu0 0.0
    %748 = vmatprep.subr.mxu0 0.0
    %749 = vmatpush1.msra.mxu0 0.0
    %750 = vmatprep.mubr.f32.mxu0 0.0
    %751 = vmatmul.mubr.f32.gmra.mrb[0].mxu0 %v684
    %v752 = vpop.f32.mrb[0].mxu0
    %v753 = vadd.f32 0.0, %v752
    %v754 = vpop.f32.mrb[0].mxu0
    %755 = vdwg.mxu0
    %v756 = vadd.f32 %v680, %v753
    %v757 = vtanh.pop %v756
    %v758 = vmul.f32 %v757, %v85
    %v759 = vadd.f32 %v758, %v86
    %v760 = vmul.f32 %v759, %v672
    %762 = vrot.lane.b32.xlu0 %v759, 32
    %v763 = vpop.permute.xlu0 %762
    %v765 = vmul.f32 %v759, %v763
    %767 = vrot.lane.b32.xlu0 %v765, 32
    %v768 = vpop.permute.xlu0 %767
    %v770 = vadd.f32 %v760, %v768
    %v771 = vtanh.pop %v770
    %773 = vrot.lane.b32.xlu0 %v771, 32
    %v774 = vpop.permute.xlu0 %773
    %v776 = vmul.f32 %v759, %v774
    %s777 = scalar_lea.vmem [#allocation4], 14
    %v778 = vld [vmem:[%s777] sm:$0x3]
    %780 = vrot.lane.b32.xlu0 %v776, 64
    %v781 = vpop.permute.xlu0 %780
    %v782 = vsel %vm90, %v781, 0
    %784 = vmatprep.subr.mxu0 0.0
    %785 = vmatpush1.msra.mxu0 %v78
    %786 = vmatprep.subr.mxu0 0.0
    %787 = vmatpush1.msra.mxu0 %v79
    %788 = vmatprep.subr.mxu0 0.0
    %789 = vmatpush1.msra.mxu0 %v80
    %790 = vmatprep.subr.mxu0 0.0
    %791 = vmatpush1.msra.mxu0 %v81
    %792 = vmatprep.subr.mxu0 0.0
    %793 = vmatpush1.msra.mxu0 0.0
    %794 = vmatprep.subr.mxu0 0.0
    %795 = vmatpush1.msra.mxu0 0.0
    %796 = vmatprep.subr.mxu0 0.0
    %797 = vmatpush1.msra.mxu0 0.0
    %798 = vmatprep.subr.mxu0 0.0
    %799 = vmatpush1.msra.mxu0 0.0
    %800 = vmatprep.subr.mxu0 0.0
    %801 = vmatpush1.msra.mxu0 0.0
    %802 = vmatprep.subr.mxu0 0.0
    %803 = vmatpush1.msra.mxu0 0.0
    %804 = vmatprep.subr.mxu0 0.0
    %805 = vmatpush1.msra.mxu0 0.0
    %806 = vmatprep.subr.mxu0 0.0
    %807 = vmatpush1.msra.mxu0 0.0
    %808 = vmatprep.subr.mxu0 0.0
    %809 = vmatpush1.msra.mxu0 0.0
    %810 = vmatprep.subr.mxu0 0.0
    %811 = vmatpush1.msra.mxu0 0.0
    %812 = vmatprep.subr.mxu0 0.0
    %813 = vmatpush1.msra.mxu0 0.0
    %814 = vmatprep.subr.mxu0 0.0
    %815 = vmatpush1.msra.mxu0 0.0
    %816 = vmatprep.subr.mxu0 0.0
    %817 = vmatpush1.msra.mxu0 0.0
    %818 = vmatprep.subr.mxu0 0.0
    %819 = vmatpush1.msra.mxu0 0.0
    %820 = vmatprep.subr.mxu0 0.0
    %821 = vmatpush1.msra.mxu0 0.0
    %822 = vmatprep.subr.mxu0 0.0
    %823 = vmatpush1.msra.mxu0 0.0
    %824 = vmatprep.subr.mxu0 0.0
    %825 = vmatpush1.msra.mxu0 0.0
    %826 = vmatprep.subr.mxu0 0.0
    %827 = vmatpush1.msra.mxu0 0.0
    %828 = vmatprep.subr.mxu0 0.0
    %829 = vmatpush1.msra.mxu0 0.0
    %830 = vmatprep.subr.mxu0 0.0
    %831 = vmatpush1.msra.mxu0 0.0
    %832 = vmatprep.subr.mxu0 0.0
    %833 = vmatpush1.msra.mxu0 0.0
    %834 = vmatprep.subr.mxu0 0.0
    %835 = vmatpush1.msra.mxu0 0.0
    %836 = vmatprep.subr.mxu0 0.0
    %837 = vmatpush1.msra.mxu0 0.0
    %838 = vmatprep.subr.mxu0 0.0
    %839 = vmatpush1.msra.mxu0 0.0
    %840 = vmatprep.subr.mxu0 0.0
    %841 = vmatpush1.msra.mxu0 0.0
    %842 = vmatprep.subr.mxu0 0.0
    %843 = vmatpush1.msra.mxu0 0.0
    %844 = vmatprep.subr.mxu0 0.0
    %845 = vmatpush1.msra.mxu0 0.0
    %846 = vmatprep.subr.mxu0 0.0
    %847 = vmatpush1.msra.mxu0 0.0
    %848 = vmatprep.mubr.f32.mxu0 0.0
    %849 = vmatmul.mubr.f32.gmra.mrb[0].mxu0 %v782
    %v850 = vpop.f32.mrb[0].mxu0
    %v851 = vadd.f32 0.0, %v850
    %v852 = vpop.f32.mrb[0].mxu0
    %853 = vdwg.mxu0
    %v854 = vadd.f32 %v778, %v851
    %v855 = vtanh.pop %v854
    %v856 = vmul.f32 %v855, %v85
    %v857 = vadd.f32 %v856, %v86
    %v858 = vmul.f32 %v857, %v770
    %860 = vrot.lane.b32.xlu0 %v857, 32
    %v861 = vpop.permute.xlu0 %860
    %v863 = vmul.f32 %v857, %v861
    %865 = vrot.lane.b32.xlu0 %v863, 32
    %v866 = vpop.permute.xlu0 %865
    %v868 = vadd.f32 %v858, %v866
    %v869 = vtanh.pop %v868
    %871 = vrot.lane.b32.xlu0 %v869, 32
    %v872 = vpop.permute.xlu0 %871
    %v874 = vmul.f32 %v857, %v872
    %876 = vrot.lane.b32.xlu0 %v874, 64
    %v877 = vpop.permute.xlu0 %876
    %vm879 = vcmask 254976
    %880 = vst.msk [vmem:[#allocation2] sm:$0x3] %vm879, %v877
    %882 = vrot.lane.b32.xlu0 %v868, 96
    %v883 = vpop.permute.xlu0 %882
    %885 = vst.msk [vmem:[#allocation3] sm:$0x3] %vm879, %v883
    // Predicated region
    $region42: #{tpu_custom_call.1} parent=1 // pred_check
      %p886 = pneg %p69
    $region43: #{tpu_custom_call.1} parent=1 // pred_check_branch
      %888 = sbr.rel (%p886) target = $region45
    $region44: #{tpu_custom_call.1} parent=1 // pred_region
      %v889 = vld [vmem:[#allocation9] sm:$0xff]
      %v890 = vld [vmem:[#allocation9 + $0x8] sm:$0xff]
      %v891 = vld [vmem:[#allocation9 + $0x10] sm:$0xff]
      %v892 = vld [vmem:[#allocation9 + $0x18] sm:$0xff]
      %v893 = vld [vmem:[%s5] sm:$0x1]
      %v895 = vlaneseq
      %v896 = vshrl.u32 %v895, 7
      %v897 = vsub.s32 0, %v896
      %v898 = vrot.slane %v893, %v897
      %v900 = vsel %vm90, %v877, 0
      %902 = vmatprep.subr.mxu0 0.0
      %903 = vmatpush1.msra.mxu0 %v889
      %904 = vmatprep.subr.mxu0 0.0
      %905 = vmatpush1.msra.mxu0 %v890
      %906 = vmatprep.subr.mxu0 0.0
      %907 = vmatpush1.msra.mxu0 %v891
      %908 = vmatprep.subr.mxu0 0.0
      %909 = vmatpush1.msra.mxu0 %v892
      %910 = vmatprep.subr.mxu0 0.0
      %911 = vmatpush1.msra.mxu0 0.0
      %912 = vmatprep.subr.mxu0 0.0
      %913 = vmatpush1.msra.mxu0 0.0
      %914 = vmatprep.subr.mxu0 0.0
      %915 = vmatpush1.msra.mxu0 0.0
      %916 = vmatprep.subr.mxu0 0.0
      %917 = vmatpush1.msra.mxu0 0.0
      %918 = vmatprep.subr.mxu0 0.0
      %919 = vmatpush1.msra.mxu0 0.0
      %920 = vmatprep.subr.mxu0 0.0
      %921 = vmatpush1.msra.mxu0 0.0
      %922 = vmatprep.subr.mxu0 0.0
      %923 = vmatpush1.msra.mxu0 0.0
      %924 = vmatprep.subr.mxu0 0.0
      %925 = vmatpush1.msra.mxu0 0.0
      %926 = vmatprep.subr.mxu0 0.0
      %927 = vmatpush1.msra.mxu0 0.0
      %928 = vmatprep.subr.mxu0 0.0
      %929 = vmatpush1.msra.mxu0 0.0
      %930 = vmatprep.subr.mxu0 0.0
      %931 = vmatpush1.msra.mxu0 0.0
      %932 = vmatprep.subr.mxu0 0.0
      %933 = vmatpush1.msra.mxu0 0.0
      %934 = vmatprep.subr.mxu0 0.0
      %935 = vmatpush1.msra.mxu0 0.0
      %936 = vmatprep.subr.mxu0 0.0
      %937 = vmatpush1.msra.mxu0 0.0
      %938 = vmatprep.subr.mxu0 0.0
      %939 = vmatpush1.msra.mxu0 0.0
      %940 = vmatprep.subr.mxu0 0.0
      %941 = vmatpush1.msra.mxu0 0.0
      %942 = vmatprep.subr.mxu0 0.0
      %943 = vmatpush1.msra.mxu0 0.0
      %944 = vmatprep.subr.mxu0 0.0
      %945 = vmatpush1.msra.mxu0 0.0
      %946 = vmatprep.subr.mxu0 0.0
      %947 = vmatpush1.msra.mxu0 0.0
      %948 = vmatprep.subr.mxu0 0.0
      %949 = vmatpush1.msra.mxu0 0.0
      %950 = vmatprep.subr.mxu0 0.0
      %951 = vmatpush1.msra.mxu0 0.0
      %952 = vmatprep.subr.mxu0 0.0
      %953 = vmatpush1.msra.mxu0 0.0
      %954 = vmatprep.subr.mxu0 0.0
      %955 = vmatpush1.msra.mxu0 0.0
      %956 = vmatprep.subr.mxu0 0.0
      %957 = vmatpush1.msra.mxu0 0.0
      %958 = vmatprep.subr.mxu0 0.0
      %959 = vmatpush1.msra.mxu0 0.0
      %960 = vmatprep.subr.mxu0 0.0
      %961 = vmatpush1.msra.mxu0 0.0
      %962 = vmatprep.subr.mxu0 0.0
      %963 = vmatpush1.msra.mxu0 0.0
      %964 = vmatprep.subr.mxu0 0.0
      %965 = vmatpush1.msra.mxu0 0.0
      %966 = vmatprep.mubr.f32.mxu0 0.0
      %967 = vmatmul.mubr.f32.gmra.mrb[0].mxu0 %v900
      %v968 = vpop.f32.mrb[0].mxu0
      %v969 = vadd.f32 %v898, %v968
      %v970 = vpop.f32.mrb[0].mxu0
      %971 = vdwg.mxu0
      %972 = vst [vmem:[#allocation10] sm:$0x3] %v969
      %973 = vst.msk [vmem:[#allocation11] sm:$0x3] %vm879, %v877
      %974 = vst.msk [vmem:[#allocation13] sm:$0x3] %vm879, %v883
    $region45: #{tpu_custom_call.1} parent=1 // pred_fallthru
      _
    // Predicated region
    $region46: #{tpu_custom_call.1} parent=1 // pred_check
      _
    $region47: #{tpu_custom_call.1} parent=1 // pred_check_branch
      %976 = sbr.rel (0) target = $region49
    $region48: #{tpu_custom_call.1} parent=1 // pred_region
      %s978 = ssub.s32 32, 32
      %979 = vsyncadd [#allocation6], %s978
      %s981 = sshll.u32 [#allocation10], 4
      %s982 = int_to_ptr.vmem [resolvable:$true] %s981
      %984 = dma.vmem_to_hbm [thread:$0]  %s982, 32, %s6, [#allocation6]
    $region49: #{tpu_custom_call.1} parent=1 // pred_fallthru
      _
    // Predicated region
    $region50: #{tpu_custom_call.1} parent=1 // pred_check
      _
    $region51: #{tpu_custom_call.1} parent=1 // pred_check_branch
      %986 = sbr.rel (0) target = $region53
    $region52: #{tpu_custom_call.1} parent=1 // pred_region
      %s988 = ssub.s32 32, 32
      %989 = vsyncadd [#allocation12], %s988
      %s991 = sshll.u32 [#allocation11], 4
      %s992 = int_to_ptr.vmem [resolvable:$true] %s991
      %994 = dma.vmem_to_hbm [thread:$0]  %s992, 32, %s7, [#allocation12]
    $region53: #{tpu_custom_call.1} parent=1 // pred_fallthru
      _
    // Predicated region
    $region54: #{tpu_custom_call.1} parent=1 // pred_check
      _
    $region55: #{tpu_custom_call.1} parent=1 // pred_check_branch
      %996 = sbr.rel (0) target = $region57
    $region56: #{tpu_custom_call.1} parent=1 // pred_region
      %s998 = ssub.s32 32, 32
      %999 = vsyncadd [#allocation12], %s998
      %s1001 = sshll.u32 [#allocation13], 4
      %s1002 = int_to_ptr.vmem [resolvable:$true] %s1001
      %1004 = dma.vmem_to_hbm [thread:$0]  %s1002, 32, %s8, [#allocation12]
    $region57: #{tpu_custom_call.1} parent=1 // pred_fallthru
      _
    // Predicated region
    $region58: #{tpu_custom_call.1} parent=1 // pred_check
      _
    $region59: #{tpu_custom_call.1} parent=1 // pred_check_branch
      %1006 = sbr.rel (0) target = $region61
    $region60: #{tpu_custom_call.1} parent=1 // pred_region
      %1007 = dma.done [#allocation6], 32
    $region61: #{tpu_custom_call.1} parent=1 // pred_fallthru
      _
    // Predicated region
    $region62: #{tpu_custom_call.1} parent=1 // pred_check
      _
    $region63: #{tpu_custom_call.1} parent=1 // pred_check_branch
      %1009 = sbr.rel (0) target = $region65
    $region64: #{tpu_custom_call.1} parent=1 // pred_region
      %1010 = dma.done [#allocation12], 32
    $region65: #{tpu_custom_call.1} parent=1 // pred_fallthru
      _
    // Predicated region
    $region66: #{tpu_custom_call.1} parent=1 // pred_check
      _
    $region67: #{tpu_custom_call.1} parent=1 // pred_check_branch
      %1012 = sbr.rel (0) target = $region69
    $region68: #{tpu_custom_call.1} parent=1 // pred_region
      %1013 = dma.done [#allocation12], 32
    $region69: #{tpu_custom_call.1} parent=1 // pred_fallthru
      _
    %1014 = vsyncpa [#allocation5], 1
    %1015 = vsyncpa [#allocation8], 1
    %1016 = vsyncpa [#allocation6], 1
    %1017 = vsyncpa [#allocation12], 1

</llo_original>
